<compile_context>
chip_gen: v7x
topology: tpu7x:2x2x1
jax: 0.10.0
libtpu: 0.0.40
codegen_flags: <defaults>
</compile_context>

<pallas_src>
import functools

import jax
import jax.numpy as jnp
from jax import lax
from jax.experimental import pallas as pl
from jax.experimental.pallas import tpu as pltpu

LANE = 128  # lane width


def _round_up(n, m):
    return ((n + m - 1) // m) * m


def _largest_divisor_leq(n, cap):
    cap = max(1, min(n, cap))
    for d in range(cap, 0, -1):
        if n % d == 0:
            return d
    return 1


def _chip_budgets():
    """Returns (max element-rows per block, vmem_limit_bytes) per TPU generation."""
    try:
        cap = int(pltpu.get_tpu_info().vmem_capacity_bytes)
    except Exception:
        cap = 64 * 1024 * 1024
    if cap >= 128 * 1024 * 1024:           # v5e / v6e: 128 MiB VMEM
        return 16384, 96 * 1024 * 1024     # 8 MiB f32 blocks, ~40 MiB live
    return 8192, 48 * 1024 * 1024          # v7x (64 MiB VMEM) / unknown: 4 MiB blocks


def lif_kernel(x_ref, spike_ref, mem_ref, *, tau, vth, tile_t, out_dtype):
    # x_ref / spike_ref: (tile_b, tile_t, tile_rows, LANE)
    # mem_ref (scratch) : (tile_b, 1, tile_rows, LANE) float32, carried across time blocks.
    @pl.when(pl.program_id(2) == 0)
    def _():
        mem_ref[...] = jnp.zeros_like(mem_ref)

    def step(i, mem):
        xi = x_ref[:, pl.ds(i, 1)].astype(jnp.float32)
        mem = tau * mem + xi
        cond = mem > vth                              # == (mem - Vth > 0) for f32
        spike_ref[:, pl.ds(i, 1)] = cond.astype(out_dtype)
        return jnp.where(cond, 0.0, mem)              # == mem * (1 - spike)

    mem_ref[...] = lax.fori_loop(0, tile_t, step, mem_ref[...],
                                 unroll=min(tile_t, 8))
    # TODO(synk): surrogate-gradient backward (Learnable_ActFun1/2.backward) is
    # not implemented; only the forward pass is reproduced.


@functools.partial(jax.jit, static_argnames=("tau", "Vth", "out_dtype"))
def lif_forward(x, tau=0.2, Vth=0.5, out_dtype=jnp.float32):
    """x: (B, T, *feature_dims) -> spike of the same shape, dtype out_dtype."""
    # TODO(synk): tau/Vth are compile-time constants here; learnable (traced)
    # parameters would need to be fed as SMEM scalars instead.
    if x.dtype != jnp.bfloat16:
        x = jnp.asarray(x, jnp.float32)
    B, T = x.shape[0], x.shape[1]
    feat = x.shape[2:]

    # Native (B, T, F) layout -- no transposes; pad only the feature axis.
    x3 = x.reshape(B, T, -1)
    F = x3.shape[2]

    max_block_rows, vmem_limit = _chip_budgets()
    out_dt = jnp.dtype(out_dtype)
    sub = 16 if (x3.dtype == jnp.bfloat16 or out_dt == jnp.bfloat16) else 8

    # Feature tiling: pad only to n_r * tile_rows (waste bounded by < sub rows/tile).
    rows0 = pl.cdiv(F, LANE)
    n_r = pl.cdiv(rows0, max_block_rows)
    tile_rows = _round_up(pl.cdiv(rows0, n_r), sub)
    # Megacore: if batch and feature would give only one parallel block (B == 1),
    # split the feature axis so both TensorCores (v7x) get work. Cheap elsewhere.
    if B == 1 and n_r == 1 and rows0 >= 2 * sub:
        n_r = 2
        tile_rows = _round_up(pl.cdiv(rows0, n_r), sub)
    rows = n_r * tile_rows
    Fp = rows * LANE
    if Fp != F:
        # TODO(synk): ragged last feature tile could be masked in-kernel to avoid
        # this extra HBM pad/slice pass; only taken when F % 128 != 0.
        x3 = jnp.pad(x3, ((0, 0), (0, 0), (0, Fp - F)))
    x4 = x3.reshape(B, T, rows, LANE)

    # Time tiling: largest divisor of T whose block fits the per-block row budget.
    tile_t = _largest_divisor_leq(T, max(1, max_block_rows // tile_rows))

    # Batch tiling fallback, only when the block already covers full T and full
    # feature rows (block stays a single contiguous slab -> no strided DMA) and
    # while keeping >= 2 parallel blocks for the v7x megacore.
    tile_b = 1
    if tile_t == T and n_r == 1 and B >= 2:
        b_cap = min(max(1, max_block_rows // (tile_t * tile_rows)), B // 2)
        tile_b = _largest_divisor_leq(B, b_cap)

    grid = (B // tile_b, n_r, T // tile_t)  # (batch, feature, time-blocks)
    block = (tile_b, tile_t, tile_rows, LANE)

    elems = B * T * rows * LANE
    cost = pl.CostEstimate(
        flops=int(5 * elems),
        transcendentals=0,
        bytes_accessed=int(elems * (x4.dtype.itemsize + out_dt.itemsize)),
    )

    spike4 = pl.pallas_call(
        functools.partial(lif_kernel, tau=float(tau), vth=float(Vth),
                          tile_t=tile_t, out_dtype=out_dt),
        out_shape=jax.ShapeDtypeStruct((B, T, rows, LANE), out_dt),
        grid_spec=pltpu.PrefetchScalarGridSpec(
            num_scalar_prefetch=0,
            grid=grid,
            in_specs=[pl.BlockSpec(block, lambda b, r, t: (b, t, r, 0))],
            out_specs=pl.BlockSpec(block, lambda b, r, t: (b, t, r, 0)),
            scratch_shapes=[pltpu.VMEM((tile_b, 1, tile_rows, LANE), jnp.float32)],
        ),
        compiler_params=pltpu.CompilerParams(
            dimension_semantics=("parallel", "parallel", "arbitrary"),
            vmem_limit_bytes=vmem_limit,
        ),
        cost_estimate=cost,
    )(x4)

    # Padded features see x=0 -> mem=0 -> spike=0; sliced off only if padded.
    spike = spike4.reshape(B, T, Fp)
    if Fp != F:
        spike = spike[:, :, :F]
    return spike.reshape((B, T) + feat)


def lif_forward_ref(x, tau=0.2, Vth=0.5):
    """Pure-JAX reference mirroring the PyTorch loop."""
    x = jnp.asarray(x, jnp.float32)
    T = x.shape[1]
    mem = jnp.zeros(x.shape[:1] + x.shape[2:], jnp.float32)
    spikes = []
    for t in range(T):
        mem = tau * mem + x[:, t]
        s = (mem - Vth > 0.0).astype(jnp.float32)
        spikes.append(s)
        mem = mem * (1.0 - s)
    return jnp.stack(spikes, axis=1)


if __name__ == "__main__":
    key = jax.random.PRNGKey(0)
    B, T, C, H, W = 2, 8, 4, 16, 16
    x = jax.random.normal(key, (B, T, C, H, W), dtype=jnp.float32)

    spike = lif_forward(x, tau=0.2, Vth=0.5)
    spike = jax.block_until_ready(spike)

    ref = lif_forward_ref(x, tau=0.2, Vth=0.5)
    assert spike.shape == x.shape
    assert spike.dtype == jnp.float32
    assert bool(jnp.all(spike == ref)), "mismatch vs reference"

    print("KERNEL_OK")
</pallas_src>

<mosaic_0001>
module attributes {stable_mosaic.version = 11 : i64} {
  func.func @lif_kernel(%arg0: i32, %arg1: i32, %arg2: i32, %arg3: memref<1x8x8x128xf32, #tpu.memory_space<vmem>>, %arg4: memref<1x8x8x128xf32, #tpu.memory_space<vmem>>, %arg5: memref<1x1x8x128xf32, #tpu.memory_space<vmem>>) attributes {dimension_semantics = [#tpu.dimension_semantics<parallel>, #tpu.dimension_semantics<parallel>, #tpu.dimension_semantics<arbitrary>], iteration_bounds = array<i64: 2, 1, 1>, scalar_prefetch = 0 : i64, scratch_operands = 1 : i64, tpu.core_type = #tpu.core_type<tc>, window_params = [{transform_indices = @transform_0, window_bounds = array<i64: 1, 8, 8, 128>}, {transform_indices = @transform_1, window_bounds = array<i64: 1, 8, 8, 128>}]} {
    %c0_i32 = arith.constant 0 : i32
    %0 = arith.cmpi eq, %arg2, %c0_i32 : i32
    %1 = arith.extui %0 : i1 to i32
    %c0_i32_0 = arith.constant 0 : i32
    %2 = arith.cmpi ne, %1, %c0_i32_0 : i32
    scf.if %2 {
      %cst_80 = arith.constant 0.000000e+00 : f32
      %109 = vector.broadcast %cst_80 : f32 to vector<1x1x8x128xf32>
      %c0_81 = arith.constant 0 : index
      %c0_82 = arith.constant 0 : index
      %c0_83 = arith.constant 0 : index
      %c0_84 = arith.constant 0 : index
      %110 = vector.load %arg5[%c0_81, %c0_82, %c0_83, %c0_84] : memref<1x1x8x128xf32, #tpu.memory_space<vmem>>, vector<1x1x8x128xf32>
      tpu.vector_store %arg5[%c0_81, %c0_82, %c0_83, %c0_84], %109 {strides = array<i32>} : memref<1x1x8x128xf32, #tpu.memory_space<vmem>>, vector<1x1x8x128xf32>,
    } else {
    }
    %c0 = arith.constant 0 : index
    %c0_1 = arith.constant 0 : index
    %c0_2 = arith.constant 0 : index
    %c0_3 = arith.constant 0 : index
    %3 = vector.load %arg5[%c0, %c0_1, %c0_2, %c0_3] : memref<1x1x8x128xf32, #tpu.memory_space<vmem>>, vector<1x1x8x128xf32>
    %c0_i32_4 = arith.constant 0 : i32
    %c0_5 = arith.constant 0 : index
    %4 = arith.index_cast %c0_i32_4 : i32 to index
    %c0_6 = arith.constant 0 : index
    %c0_7 = arith.constant 0 : index
    %5 = vector.load %arg3[%c0_5, %4, %c0_6, %c0_7] : memref<1x8x8x128xf32, #tpu.memory_space<vmem>>, vector<1x1x8x128xf32>
    %cst = arith.constant 2.000000e-01 : f32
    %6 = vector.broadcast %cst : f32 to vector<1x1x8x128xf32>
    %7 = arith.mulf %6, %3 : vector<1x1x8x128xf32>
    %8 = arith.addf %7, %5 : vector<1x1x8x128xf32>
    %cst_8 = arith.constant 5.000000e-01 : f32
    %9 = vector.broadcast %cst_8 : f32 to vector<1x1x8x128xf32>
    %10 = arith.cmpf ogt, %8, %9 : vector<1x1x8x128xf32>
    %11 = arith.extui %10 : vector<1x1x8x128xi1> to vector<1x1x8x128xi32>
    %12 = arith.sitofp %11 : vector<1x1x8x128xi32> to vector<1x1x8x128xf32>
    %c0_9 = arith.constant 0 : index
    %13 = arith.index_cast %c0_i32_4 : i32 to index
    %c0_10 = arith.constant 0 : index
    %c0_11 = arith.constant 0 : index
    %14 = vector.load %arg4[%c0_9, %13, %c0_10, %c0_11] : memref<1x8x8x128xf32, #tpu.memory_space<vmem>>, vector<1x1x8x128xf32>
    tpu.vector_store %arg4[%c0_9, %13, %c0_10, %c0_11], %12 {strides = array<i32>} : memref<1x8x8x128xf32, #tpu.memory_space<vmem>>, vector<1x1x8x128xf32>,
    %cst_12 = arith.constant 0.000000e+00 : f32
    %15 = vector.broadcast %cst_12 : f32 to vector<1x1x8x128xf32>
    %16 = arith.select %10, %15, %8 : vector<1x1x8x128xi1>, vector<1x1x8x128xf32>
    %c1_i32 = arith.constant 1 : i32
    %c0_13 = arith.constant 0 : index
    %17 = arith.index_cast %c1_i32 : i32 to index
    %c0_14 = arith.constant 0 : index
    %c0_15 = arith.constant 0 : index
    %18 = vector.load %arg3[%c0_13, %17, %c0_14, %c0_15] : memref<1x8x8x128xf32, #tpu.memory_space<vmem>>, vector<1x1x8x128xf32>
    %cst_16 = arith.constant 2.000000e-01 : f32
    %19 = vector.broadcast %cst_16 : f32 to vector<1x1x8x128xf32>
    %20 = arith.mulf %19, %16 : vector<1x1x8x128xf32>
    %21 = arith.addf %20, %18 : vector<1x1x8x128xf32>
    %cst_17 = arith.constant 5.000000e-01 : f32
    %22 = vector.broadcast %cst_17 : f32 to vector<1x1x8x128xf32>
    %23 = arith.cmpf ogt, %21, %22 : vector<1x1x8x128xf32>
    %24 = arith.extui %23 : vector<1x1x8x128xi1> to vector<1x1x8x128xi32>
    %25 = arith.sitofp %24 : vector<1x1x8x128xi32> to vector<1x1x8x128xf32>
    %c0_18 = arith.constant 0 : index
    %26 = arith.index_cast %c1_i32 : i32 to index
    %c0_19 = arith.constant 0 : index
    %c0_20 = arith.constant 0 : index
    %27 = vector.load %arg4[%c0_18, %26, %c0_19, %c0_20] : memref<1x8x8x128xf32, #tpu.memory_space<vmem>>, vector<1x1x8x128xf32>
    tpu.vector_store %arg4[%c0_18, %26, %c0_19, %c0_20], %25 {strides = array<i32>} : memref<1x8x8x128xf32, #tpu.memory_space<vmem>>, vector<1x1x8x128xf32>,
    %cst_21 = arith.constant 0.000000e+00 : f32
    %28 = vector.broadcast %cst_21 : f32 to vector<1x1x8x128xf32>
    %29 = arith.select %23, %28, %21 : vector<1x1x8x128xi1>, vector<1x1x8x128xf32>
    %c2_i32 = arith.constant 2 : i32
    %c0_22 = arith.constant 0 : index
    %30 = arith.index_cast %c2_i32 : i32 to index
    %c0_23 = arith.constant 0 : index
    %c0_24 = arith.constant 0 : index
    %31 = vector.load %arg3[%c0_22, %30, %c0_23, %c0_24] : memref<1x8x8x128xf32, #tpu.memory_space<vmem>>, vector<1x1x8x128xf32>
    %cst_25 = arith.constant 2.000000e-01 : f32
    %32 = vector.broadcast %cst_25 : f32 to vector<1x1x8x128xf32>
    %33 = arith.mulf %32, %29 : vector<1x1x8x128xf32>
    %34 = arith.addf %33, %31 : vector<1x1x8x128xf32>
    %cst_26 = arith.constant 5.000000e-01 : f32
    %35 = vector.broadcast %cst_26 : f32 to vector<1x1x8x128xf32>
    %36 = arith.cmpf ogt, %34, %35 : vector<1x1x8x128xf32>
    %37 = arith.extui %36 : vector<1x1x8x128xi1> to vector<1x1x8x128xi32>
    %38 = arith.sitofp %37 : vector<1x1x8x128xi32> to vector<1x1x8x128xf32>
    %c0_27 = arith.constant 0 : index
    %39 = arith.index_cast %c2_i32 : i32 to index
    %c0_28 = arith.constant 0 : index
    %c0_29 = arith.constant 0 : index
    %40 = vector.load %arg4[%c0_27, %39, %c0_28, %c0_29] : memref<1x8x8x128xf32, #tpu.memory_space<vmem>>, vector<1x1x8x128xf32>
    tpu.vector_store %arg4[%c0_27, %39, %c0_28, %c0_29], %38 {strides = array<i32>} : memref<1x8x8x128xf32, #tpu.memory_space<vmem>>, vector<1x1x8x128xf32>,
    %cst_30 = arith.constant 0.000000e+00 : f32
    %41 = vector.broadcast %cst_30 : f32 to vector<1x1x8x128xf32>
    %42 = arith.select %36, %41, %34 : vector<1x1x8x128xi1>, vector<1x1x8x128xf32>
    %c3_i32 = arith.constant 3 : i32
    %c0_31 = arith.constant 0 : index
    %43 = arith.index_cast %c3_i32 : i32 to index
    %c0_32 = arith.constant 0 : index
    %c0_33 = arith.constant 0 : index
    %44 = vector.load %arg3[%c0_31, %43, %c0_32, %c0_33] : memref<1x8x8x128xf32, #tpu.memory_space<vmem>>, vector<1x1x8x128xf32>
    %cst_34 = arith.constant 2.000000e-01 : f32
    %45 = vector.broadcast %cst_34 : f32 to vector<1x1x8x128xf32>
    %46 = arith.mulf %45, %42 : vector<1x1x8x128xf32>
    %47 = arith.addf %46, %44 : vector<1x1x8x128xf32>
    %cst_35 = arith.constant 5.000000e-01 : f32
    %48 = vector.broadcast %cst_35 : f32 to vector<1x1x8x128xf32>
    %49 = arith.cmpf ogt, %47, %48 : vector<1x1x8x128xf32>
    %50 = arith.extui %49 : vector<1x1x8x128xi1> to vector<1x1x8x128xi32>
    %51 = arith.sitofp %50 : vector<1x1x8x128xi32> to vector<1x1x8x128xf32>
    %c0_36 = arith.constant 0 : index
    %52 = arith.index_cast %c3_i32 : i32 to index
    %c0_37 = arith.constant 0 : index
    %c0_38 = arith.constant 0 : index
    %53 = vector.load %arg4[%c0_36, %52, %c0_37, %c0_38] : memref<1x8x8x128xf32, #tpu.memory_space<vmem>>, vector<1x1x8x128xf32>
    tpu.vector_store %arg4[%c0_36, %52, %c0_37, %c0_38], %51 {strides = array<i32>} : memref<1x8x8x128xf32, #tpu.memory_space<vmem>>, vector<1x1x8x128xf32>,
    %cst_39 = arith.constant 0.000000e+00 : f32
    %54 = vector.broadcast %cst_39 : f32 to vector<1x1x8x128xf32>
    %55 = arith.select %49, %54, %47 : vector<1x1x8x128xi1>, vector<1x1x8x128xf32>
    %c4_i32 = arith.constant 4 : i32
    %c0_40 = arith.constant 0 : index
    %56 = arith.index_cast %c4_i32 : i32 to index
    %c0_41 = arith.constant 0 : index
    %c0_42 = arith.constant 0 : index
    %57 = vector.load %arg3[%c0_40, %56, %c0_41, %c0_42] : memref<1x8x8x128xf32, #tpu.memory_space<vmem>>, vector<1x1x8x128xf32>
    %cst_43 = arith.constant 2.000000e-01 : f32
    %58 = vector.broadcast %cst_43 : f32 to vector<1x1x8x128xf32>
    %59 = arith.mulf %58, %55 : vector<1x1x8x128xf32>
    %60 = arith.addf %59, %57 : vector<1x1x8x128xf32>
    %cst_44 = arith.constant 5.000000e-01 : f32
    %61 = vector.broadcast %cst_44 : f32 to vector<1x1x8x128xf32>
    %62 = arith.cmpf ogt, %60, %61 : vector<1x1x8x128xf32>
    %63 = arith.extui %62 : vector<1x1x8x128xi1> to vector<1x1x8x128xi32>
    %64 = arith.sitofp %63 : vector<1x1x8x128xi32> to vector<1x1x8x128xf32>
    %c0_45 = arith.constant 0 : index
    %65 = arith.index_cast %c4_i32 : i32 to index
    %c0_46 = arith.constant 0 : index
    %c0_47 = arith.constant 0 : index
    %66 = vector.load %arg4[%c0_45, %65, %c0_46, %c0_47] : memref<1x8x8x128xf32, #tpu.memory_space<vmem>>, vector<1x1x8x128xf32>
    tpu.vector_store %arg4[%c0_45, %65, %c0_46, %c0_47], %64 {strides = array<i32>} : memref<1x8x8x128xf32, #tpu.memory_space<vmem>>, vector<1x1x8x128xf32>,
    %cst_48 = arith.constant 0.000000e+00 : f32
    %67 = vector.broadcast %cst_48 : f32 to vector<1x1x8x128xf32>
    %68 = arith.select %62, %67, %60 : vector<1x1x8x128xi1>, vector<1x1x8x128xf32>
    %c5_i32 = arith.constant 5 : i32
    %c0_49 = arith.constant 0 : index
    %69 = arith.index_cast %c5_i32 : i32 to index
    %c0_50 = arith.constant 0 : index
    %c0_51 = arith.constant 0 : index
    %70 = vector.load %arg3[%c0_49, %69, %c0_50, %c0_51] : memref<1x8x8x128xf32, #tpu.memory_space<vmem>>, vector<1x1x8x128xf32>
    %cst_52 = arith.constant 2.000000e-01 : f32
    %71 = vector.broadcast %cst_52 : f32 to vector<1x1x8x128xf32>
    %72 = arith.mulf %71, %68 : vector<1x1x8x128xf32>
    %73 = arith.addf %72, %70 : vector<1x1x8x128xf32>
    %cst_53 = arith.constant 5.000000e-01 : f32
    %74 = vector.broadcast %cst_53 : f32 to vector<1x1x8x128xf32>
    %75 = arith.cmpf ogt, %73, %74 : vector<1x1x8x128xf32>
    %76 = arith.extui %75 : vector<1x1x8x128xi1> to vector<1x1x8x128xi32>
    %77 = arith.sitofp %76 : vector<1x1x8x128xi32> to vector<1x1x8x128xf32>
    %c0_54 = arith.constant 0 : index
    %78 = arith.index_cast %c5_i32 : i32 to index
    %c0_55 = arith.constant 0 : index
    %c0_56 = arith.constant 0 : index
    %79 = vector.load %arg4[%c0_54, %78, %c0_55, %c0_56] : memref<1x8x8x128xf32, #tpu.memory_space<vmem>>, vector<1x1x8x128xf32>
    tpu.vector_store %arg4[%c0_54, %78, %c0_55, %c0_56], %77 {strides = array<i32>} : memref<1x8x8x128xf32, #tpu.memory_space<vmem>>, vector<1x1x8x128xf32>,
    %cst_57 = arith.constant 0.000000e+00 : f32
    %80 = vector.broadcast %cst_57 : f32 to vector<1x1x8x128xf32>
    %81 = arith.select %75, %80, %73 : vector<1x1x8x128xi1>, vector<1x1x8x128xf32>
    %c6_i32 = arith.constant 6 : i32
    %c0_58 = arith.constant 0 : index
    %82 = arith.index_cast %c6_i32 : i32 to index
    %c0_59 = arith.constant 0 : index
    %c0_60 = arith.constant 0 : index
    %83 = vector.load %arg3[%c0_58, %82, %c0_59, %c0_60] : memref<1x8x8x128xf32, #tpu.memory_space<vmem>>, vector<1x1x8x128xf32>
    %cst_61 = arith.constant 2.000000e-01 : f32
    %84 = vector.broadcast %cst_61 : f32 to vector<1x1x8x128xf32>
    %85 = arith.mulf %84, %81 : vector<1x1x8x128xf32>
    %86 = arith.addf %85, %83 : vector<1x1x8x128xf32>
    %cst_62 = arith.constant 5.000000e-01 : f32
    %87 = vector.broadcast %cst_62 : f32 to vector<1x1x8x128xf32>
    %88 = arith.cmpf ogt, %86, %87 : vector<1x1x8x128xf32>
    %89 = arith.extui %88 : vector<1x1x8x128xi1> to vector<1x1x8x128xi32>
    %90 = arith.sitofp %89 : vector<1x1x8x128xi32> to vector<1x1x8x128xf32>
    %c0_63 = arith.constant 0 : index
    %91 = arith.index_cast %c6_i32 : i32 to index
    %c0_64 = arith.constant 0 : index
    %c0_65 = arith.constant 0 : index
    %92 = vector.load %arg4[%c0_63, %91, %c0_64, %c0_65] : memref<1x8x8x128xf32, #tpu.memory_space<vmem>>, vector<1x1x8x128xf32>
    tpu.vector_store %arg4[%c0_63, %91, %c0_64, %c0_65], %90 {strides = array<i32>} : memref<1x8x8x128xf32, #tpu.memory_space<vmem>>, vector<1x1x8x128xf32>,
    %cst_66 = arith.constant 0.000000e+00 : f32
    %93 = vector.broadcast %cst_66 : f32 to vector<1x1x8x128xf32>
    %94 = arith.select %88, %93, %86 : vector<1x1x8x128xi1>, vector<1x1x8x128xf32>
    %c7_i32 = arith.constant 7 : i32
    %c0_67 = arith.constant 0 : index
    %95 = arith.index_cast %c7_i32 : i32 to index
    %c0_68 = arith.constant 0 : index
    %c0_69 = arith.constant 0 : index
    %96 = vector.load %arg3[%c0_67, %95, %c0_68, %c0_69] : memref<1x8x8x128xf32, #tpu.memory_space<vmem>>, vector<1x1x8x128xf32>
    %cst_70 = arith.constant 2.000000e-01 : f32
    %97 = vector.broadcast %cst_70 : f32 to vector<1x1x8x128xf32>
    %98 = arith.mulf %97, %94 : vector<1x1x8x128xf32>
    %99 = arith.addf %98, %96 : vector<1x1x8x128xf32>
    %cst_71 = arith.constant 5.000000e-01 : f32
    %100 = vector.broadcast %cst_71 : f32 to vector<1x1x8x128xf32>
    %101 = arith.cmpf ogt, %99, %100 : vector<1x1x8x128xf32>
    %102 = arith.extui %101 : vector<1x1x8x128xi1> to vector<1x1x8x128xi32>
    %103 = arith.sitofp %102 : vector<1x1x8x128xi32> to vector<1x1x8x128xf32>
    %c0_72 = arith.constant 0 : index
    %104 = arith.index_cast %c7_i32 : i32 to index
    %c0_73 = arith.constant 0 : index
    %c0_74 = arith.constant 0 : index
    %105 = vector.load %arg4[%c0_72, %104, %c0_73, %c0_74] : memref<1x8x8x128xf32, #tpu.memory_space<vmem>>, vector<1x1x8x128xf32>
    tpu.vector_store %arg4[%c0_72, %104, %c0_73, %c0_74], %103 {strides = array<i32>} : memref<1x8x8x128xf32, #tpu.memory_space<vmem>>, vector<1x1x8x128xf32>,
    %cst_75 = arith.constant 0.000000e+00 : f32
    %106 = vector.broadcast %cst_75 : f32 to vector<1x1x8x128xf32>
    %107 = arith.select %101, %106, %99 : vector<1x1x8x128xi1>, vector<1x1x8x128xf32>
    %c8_i32 = arith.constant 8 : i32
    %c0_76 = arith.constant 0 : index
    %c0_77 = arith.constant 0 : index
    %c0_78 = arith.constant 0 : index
    %c0_79 = arith.constant 0 : index
    %108 = vector.load %arg5[%c0_76, %c0_77, %c0_78, %c0_79] : memref<1x1x8x128xf32, #tpu.memory_space<vmem>>, vector<1x1x8x128xf32>
    tpu.vector_store %arg5[%c0_76, %c0_77, %c0_78, %c0_79], %107 {strides = array<i32>} : memref<1x1x8x128xf32, #tpu.memory_space<vmem>>, vector<1x1x8x128xf32>,
    return
  }
  func.func @transform_0(%arg0: i32, %arg1: i32, %arg2: i32) -> (i32, i32, i32, i32) {
    %c0_i32 = arith.constant 0 : i32
    %c0_i32_0 = arith.constant 0 : i32
    return %arg0, %arg2, %arg1, %c0_i32 : i32, i32, i32, i32
  }
  func.func @transform_1(%arg0: i32, %arg1: i32, %arg2: i32) -> (i32, i32, i32, i32) {
    %c0_i32 = arith.constant 0 : i32
    %c0_i32_0 = arith.constant 0 : i32
    return %arg0, %arg2, %arg1, %c0_i32 : i32, i32, i32, i32
  }
}

</mosaic_0001>

<llo_original>
// kernel: lif_forward.1
$region0: #{lif_forward.1}
  #allocation0 [shape = 'u32[]', space=smem, size = 0x4, offset = 0x4, fixed_abs, tag = 'smem constant byte address 0x4 - core index']
  #allocation1 [shape = 'u32[144,128]{1,0:T(1,128)}', space=vmem, size = 0x12000, scoped, tag = 'internal scratch']
  #allocation2 [shape = 'f32[1,1,8,128]{3,2,1,0:T(8,128)}', space=vmem, size = 0x1000, scoped, tag = 'scratch operand']
  %s0 = inlined_call_operand.vmem [shape: f32[2,8,8,128], index: 0, kind: input, shape index: {}]
  %s1 = inlined_call_operand.vmem [shape: f32[2,8,8,128], index: 1, kind: output, shape index: {}]
  %s2 = sld [smem:[#allocation0]]
  $region41: #{lif_forward.1} parent=0
    _
  %s4 = ssub.s32 1, %s2
  %s5 = scalar_select 0, %s4, %s2
  loop: start=0, step=1, limit=4
  $region2: #{lif_forward.1} parent=0 // loop_pre_header
    _
  $region3: #{lif_forward.1} parent=0 // loop_header
    %s7 = sphi 0, %s11
    %p8 = scmp.ge.s32.totalorder %s7, 4
    %s14 = sphi 0, %s33
    %s15 = sphi 0, %s29
    %s16 = sphi 0, %s25
    %s17 = sphi 0, %s14
    %s18 = sphi 0, %s15
    %s19 = sphi 0, %s16
    %s20 = sphi 0, %s17
    %s21 = sphi 0, %s18
    %s22 = sphi 0, %s19
    %s40 = sphi 0, %s42
    %s43 = sphi 0, %s40
    %s44 = sphi 0, %s43
    %s60 = sphi 0, %s44
    %s70 = sphi 0, %s72
    %s73 = sphi 0, %s70
    %s74 = sphi 0, %s73
    %s90 = sphi 0, %s74
  $region4: #{lif_forward.1} parent=0 // loop_header_branch
    %10 = sbr.rel (%p8) target = $region8
  $region5: #{lif_forward.1} parent=0 // loop_body
    %s12 = ssub.s32 %s7, 1
    %s13 = ssub.s32 %s7, 2
    %s23 = sadd.s32 1, %s16
    %p24 = scmp.ge.s32.totalorder %s23, 1
    %s25 = scalar_select %p24, 0, %s23
    %s26 = sadd.s32 1, %s15
    %s27 = scalar_select %p24, %s26, %s15
    %p28 = scmp.ge.s32.totalorder %s27, 1
    %s29 = scalar_select %p28, 0, %s27
    %s30 = sadd.s32 1, %s14
    %s31 = scalar_select %p28, %s30, %s14
    %p32 = scmp.ge.s32.totalorder %s31, 2
    %s33 = scalar_select %p32, 0, %s31
    %s34 = ssub.s32 %s14, %s33
    %s35 = ssub.s32 %s16, %s25
    %s36 = sor.u32 %s34, %s35
    %s37 = ssub.s32 %s15, %s29
    %s38 = sor.u32 %s36, %s37
    %p39 = scmp.eq.s32.totalorder %s38, 0
    %s41 = sadd.s32 %s40, 1
    %s42 = scalar_select %p39, %s40, %s41
    %p45 = pneg %p39
    %p46 = scmp.eq.s32.totalorder %s7, 1
    %p47 = por %p45, %p46
    %p48 = scmp.ne.s32.totalorder %s40, %s43
    %p49 = scmp.eq.s32.totalorder %s7, 0
    %p50 = por %p48, %p49
    %p51 = scmp.ne.s32.totalorder %s40, %s43
    %p52 = scmp.eq.s32.totalorder %s12, 1
    %p53 = por %p51, %p52
    %p54 = scmp.ne.s32.totalorder %s43, %s44
    %p55 = scmp.eq.s32.totalorder %s12, 0
    %p56 = por %p54, %p55
    %p57 = scmp.ne.s32.totalorder %s43, %s44
    %p58 = scmp.eq.s32.totalorder %s13, 1
    %p59 = por %p57, %p58
    %p61 = scmp.ne.s32.totalorder %s44, %s60
    %p62 = scmp.eq.s32.totalorder %s13, 0
    %p63 = por %p61, %p62
    %s64 = ssub.s32 %s14, %s33
    %s65 = ssub.s32 %s16, %s25
    %s66 = sor.u32 %s64, %s65
    %s67 = ssub.s32 %s15, %s29
    %s68 = sor.u32 %s66, %s67
    %p69 = scmp.eq.s32.totalorder %s68, 0
    %s71 = sadd.s32 %s70, 1
    %s72 = scalar_select %p69, %s70, %s71
    %p75 = pneg %p69
    %p76 = scmp.eq.s32.totalorder %s7, 1
    %p77 = por %p75, %p76
    %p78 = scmp.ne.s32.totalorder %s70, %s73
    %p79 = scmp.eq.s32.totalorder %s7, 0
    %p80 = por %p78, %p79
    %p81 = scmp.ne.s32.totalorder %s70, %s73
    %p82 = scmp.eq.s32.totalorder %s12, 1
    %p83 = por %p81, %p82
    %p84 = scmp.ne.s32.totalorder %s73, %s74
    %p85 = scmp.eq.s32.totalorder %s12, 0
    %p86 = por %p84, %p85
    %p87 = scmp.ne.s32.totalorder %s73, %s74
    %p88 = scmp.eq.s32.totalorder %s13, 1
    %p89 = por %p87, %p88
    %p91 = scmp.ne.s32.totalorder %s74, %s90
    %p92 = scmp.eq.s32.totalorder %s13, 0
    %p93 = por %p91, %p92
    %p94 = scmp.le.s32.totalorder 1, %s7
    %p95 = scmp.lt.s32.totalorder %s7, 3
    %p96 = pnand %p94, %p95
    %p97 = pneg %p96
    // Predicated region
    $region9: #{lif_forward.1} parent=5 // pred_check
      _
    $region10: #{lif_forward.1} parent=5 // pred_check_branch
      %99 = sbr.rel (%p96) target = $region12
    $region11: #{lif_forward.1} parent=5 // pred_region
      %s100 = ssub.s32 %s7, 1
    $region12: #{lif_forward.1} parent=5 // pred_fallthru
      _
    %p101 = scmp.lt.s32.totalorder %s7, 2
    // Predicated region
    $region13: #{lif_forward.1} parent=5 // pred_check
      %p102 = pneg %p101
    $region14: #{lif_forward.1} parent=5 // pred_check_branch
      %104 = sbr.rel (%p102) target = $region16
    $region15: #{lif_forward.1} parent=5 // pred_region
      // Predicated region
      $region17: #{lif_forward.1} parent=15 // pred_check
        %p105 = pneg %p50
      $region18: #{lif_forward.1} parent=15 // pred_check_branch
        %107 = sbr.rel (%p105) target = $region20
      $region19: #{lif_forward.1} parent=15 // pred_region
        %s108 = smul.u32 8, %s16
        %p109 = scmp.lt.s32.totalorder %s14, 1
        %s110 = scalar_select %p109, %s14, 1
        %p111 = scmp.lt.s32.totalorder %s108, 7
        %s112 = scalar_select %p111, %s108, 7
        %p113 = scmp.lt.s32.totalorder %s15, 0
        %s114 = scalar_select %p113, %s15, 0
        %s115 = sadd.s32 %s114, %s112
        %s116 = smul.addr %s110, 8
        %s117 = sadd.s32 %s115, %s116
        %s118 = smul.addr %s117, 8
        %s119 = scalar_lea.vmem %s0, %s118
        %s120 = smul.u32 8, %s16
      $region20: #{lif_forward.1} parent=15 // pred_fallthru
        _
    $region16: #{lif_forward.1} parent=5 // pred_fallthru
      _
    %p121 = scmp.le.s32.totalorder 1, %s7
    %p122 = scmp.lt.s32.totalorder %s7, 3
    %p123 = pnand %p121, %p122
    %p124 = pneg %p123
    // Predicated region
    $region21: #{lif_forward.1} parent=5 // pred_check
      _
    $region22: #{lif_forward.1} parent=5 // pred_check_branch
      %126 = sbr.rel (%p123) target = $region24
    $region23: #{lif_forward.1} parent=5 // pred_region
      %s127 = ssub.s32 %s7, 1
      %s128 = smul.u32 8, %s19
      %p129 = scmp.lt.s32.totalorder %s17, 1
      %s130 = scalar_select %p129, %s17, 1
      %p131 = scmp.lt.s32.totalorder %s128, 7
      %s132 = scalar_select %p131, %s128, 7
      %p133 = scmp.lt.s32.totalorder %s18, 0
      %s134 = scalar_select %p133, %s18, 0
      %s135 = sadd.s32 %s134, %s132
      %s136 = smul.addr %s130, 8
      %s137 = sadd.s32 %s135, %s136
      %s138 = smul.addr %s137, 8
      %s139 = scalar_lea.vmem %s0, %s138
      %p140 = pneg %p56
      %p141 = pneg %p53
      %p142 = pneg %p86
      %p143 = pneg %p83
      %s144 = smul.u32 8, %s19
      %p145 = scmp.lt.s32.totalorder %s17, 1
      %s146 = scalar_select %p145, %s17, 1
      %p147 = scmp.lt.s32.totalorder %s144, 7
      %s148 = scalar_select %p147, %s144, 7
      %p149 = scmp.lt.s32.totalorder %s18, 0
      %s150 = scalar_select %p149, %s18, 0
      %s151 = sadd.s32 %s150, %s148
      %s152 = smul.addr %s146, 8
      %s153 = sadd.s32 %s151, %s152
      %s154 = smul.addr %s153, 8
      %s155 = scalar_lea.vmem %s1, %s154
      %s156 = smul.u32 8, %s19
      %p157 = scmp.lt.s32.totalorder %s17, 1
      %s158 = scalar_select %p157, %s17, 1
      %p159 = scmp.lt.s32.totalorder %s156, 7
      %s160 = scalar_select %p159, %s156, 7
      %p161 = scmp.lt.s32.totalorder %s18, 0
      %s162 = scalar_select %p161, %s18, 0
      %s163 = sadd.s32 %s162, %s160
      %s164 = smul.addr %s158, 8
      %s165 = sadd.s32 %s163, %s164
      %s166 = smul.addr %s165, 8
      %s167 = scalar_lea.vmem %s0, %s166
      %s168 = smul.u32 8, %s19
      %s169 = smul.u32 8, %s19
      %p170 = scmp.lt.s32.totalorder %s17, 1
      %s171 = scalar_select %p170, %s17, 1
      %p172 = scmp.lt.s32.totalorder %s169, 7
      %s173 = scalar_select %p172, %s169, 7
      %p174 = scmp.lt.s32.totalorder %s18, 0
      %s175 = scalar_select %p174, %s18, 0
      %s176 = sadd.s32 %s175, %s173
      %s177 = smul.addr %s171, 8
      %s178 = sadd.s32 %s176, %s177
      %s179 = smul.addr %s178, 8
      %s180 = scalar_lea.vmem %s1, %s179
      %s181 = smul.u32 8, %s19
      %p182 = scmp.eq.s32.totalorder %s19, 0
      // Predicated region
      $region25: #{lif_forward.1} parent=23 // pred_check
        %p183 = pneg %p182
      $region26: #{lif_forward.1} parent=23 // pred_check_branch
        %185 = sbr.rel (%p183) target = $region28
      $region27: #{lif_forward.1} parent=23 // pred_region
        %186 = vst [vmem:[#allocation2] sm:$0xff] 0.0
      $region28: #{lif_forward.1} parent=23 // pred_fallthru
        _
      %v187 = vld [vmem:[#allocation2] sm:$0xff]
      %v188 = vld [vmem:[%s167] sm:$0xff]
      %v189 = vmul.f32 %v187, 0.2
      %v190 = vadd.f32 %v189, %v188
      %vm191 = vcmp.gt.f32.partialorder %v190, 0.5
      %v192 = vsel %vm191, 1, 0
      %v193 = vcvt.s32.f32 %v192
      %194 = vst [vmem:[%s180] sm:$0xff] %v193
      %v195 = vsel %vm191, 0.0, %v190
      %s196 = scalar_lea.vmem %s167, 8
      %v197 = vld [vmem:[%s196] sm:$0xff]
      %v198 = vmul.f32 %v195, 0.2
      %v199 = vadd.f32 %v198, %v197
      %vm200 = vcmp.gt.f32.partialorder %v199, 0.5
      %v201 = vsel %vm200, 1, 0
      %v202 = vcvt.s32.f32 %v201
      %s203 = scalar_lea.vmem %s180, 8
      %204 = vst [vmem:[%s203] sm:$0xff] %v202
      %v205 = vsel %vm200, 0.0, %v199
      %s206 = scalar_lea.vmem %s167, 16
      %v207 = vld [vmem:[%s206] sm:$0xff]
      %v208 = vmul.f32 %v205, 0.2
      %v209 = vadd.f32 %v208, %v207
      %vm210 = vcmp.gt.f32.partialorder %v209, 0.5
      %v211 = vsel %vm210, 1, 0
      %v212 = vcvt.s32.f32 %v211
      %s213 = scalar_lea.vmem %s180, 16
      %214 = vst [vmem:[%s213] sm:$0xff] %v212
      %v215 = vsel %vm210, 0.0, %v209
      %s216 = scalar_lea.vmem %s167, 24
      %v217 = vld [vmem:[%s216] sm:$0xff]
      %v218 = vmul.f32 %v215, 0.2
      %v219 = vadd.f32 %v218, %v217
      %vm220 = vcmp.gt.f32.partialorder %v219, 0.5
      %v221 = vsel %vm220, 1, 0
      %v222 = vcvt.s32.f32 %v221
      %s223 = scalar_lea.vmem %s180, 24
      %224 = vst [vmem:[%s223] sm:$0xff] %v222
      %v225 = vsel %vm220, 0.0, %v219
      %s226 = scalar_lea.vmem %s167, 32
      %v227 = vld [vmem:[%s226] sm:$0xff]
      %v228 = vmul.f32 %v225, 0.2
      %v229 = vadd.f32 %v228, %v227
      %vm230 = vcmp.gt.f32.partialorder %v229, 0.5
      %v231 = vsel %vm230, 1, 0
      %v232 = vcvt.s32.f32 %v231
      %s233 = scalar_lea.vmem %s180, 32
      %234 = vst [vmem:[%s233] sm:$0xff] %v232
      %v235 = vsel %vm230, 0.0, %v229
      %s236 = scalar_lea.vmem %s167, 40
      %v237 = vld [vmem:[%s236] sm:$0xff]
      %v238 = vmul.f32 %v235, 0.2
      %v239 = vadd.f32 %v238, %v237
      %vm240 = vcmp.gt.f32.partialorder %v239, 0.5
      %v241 = vsel %vm240, 1, 0
      %v242 = vcvt.s32.f32 %v241
      %s243 = scalar_lea.vmem %s180, 40
      %244 = vst [vmem:[%s243] sm:$0xff] %v242
      %v245 = vsel %vm240, 0.0, %v239
      %s246 = scalar_lea.vmem %s167, 48
      %v247 = vld [vmem:[%s246] sm:$0xff]
      %v248 = vmul.f32 %v245, 0.2
      %v249 = vadd.f32 %v248, %v247
      %vm250 = vcmp.gt.f32.partialorder %v249, 0.5
      %v251 = vsel %vm250, 1, 0
      %v252 = vcvt.s32.f32 %v251
      %s253 = scalar_lea.vmem %s180, 48
      %254 = vst [vmem:[%s253] sm:$0xff] %v252
      %v255 = vsel %vm250, 0.0, %v249
      %s256 = scalar_lea.vmem %s167, 56
      %v257 = vld [vmem:[%s256] sm:$0xff]
      %v258 = vmul.f32 %v255, 0.2
      %v259 = vadd.f32 %v258, %v257
      %vm260 = vcmp.gt.f32.partialorder %v259, 0.5
      %v261 = vsel %vm260, 1, 0
      %v262 = vcvt.s32.f32 %v261
      %s263 = scalar_lea.vmem %s180, 56
      %264 = vst [vmem:[%s263] sm:$0xff] %v262
      %v265 = vsel %vm260, 0.0, %v259
      %266 = vst [vmem:[#allocation2] sm:$0xff] %v265
      %s267 = smul.u32 8, %s19
      %p268 = scmp.lt.s32.totalorder %s17, 1
      %s269 = scalar_select %p268, %s17, 1
      %p270 = scmp.lt.s32.totalorder %s267, 7
      %s271 = scalar_select %p270, %s267, 7
      %p272 = scmp.lt.s32.totalorder %s18, 0
      %s273 = scalar_select %p272, %s18, 0
      %s274 = sadd.s32 %s273, %s271
      %s275 = smul.addr %s269, 8
      %s276 = sadd.s32 %s274, %s275
      %s277 = smul.addr %s276, 8
      %s278 = scalar_lea.vmem %s1, %s277
      // Predicated region
      $region29: #{lif_forward.1} parent=23 // pred_check
        %p279 = pneg %p83
      $region30: #{lif_forward.1} parent=23 // pred_check_branch
        %281 = sbr.rel (%p279) target = $region32
      $region31: #{lif_forward.1} parent=23 // pred_region
        %s282 = smul.u32 8, %s19
      $region32: #{lif_forward.1} parent=23 // pred_fallthru
        _
    $region24: #{lif_forward.1} parent=5 // pred_fallthru
      _
    %p283 = scmp.le.s32.totalorder 2, %s7
    // Predicated region
    $region33: #{lif_forward.1} parent=5 // pred_check
      %p284 = pneg %p283
    $region34: #{lif_forward.1} parent=5 // pred_check_branch
      %286 = sbr.rel (%p284) target = $region36
    $region35: #{lif_forward.1} parent=5 // pred_region
      %s287 = ssub.s32 %s7, 2
      // Predicated region
      $region37: #{lif_forward.1} parent=35 // pred_check
        %p288 = pneg %p89
      $region38: #{lif_forward.1} parent=35 // pred_check_branch
        %290 = sbr.rel (%p288) target = $region40
      $region39: #{lif_forward.1} parent=35 // pred_region
        %s291 = smul.u32 8, %s22
        %p292 = scmp.lt.s32.totalorder %s20, 1
        %s293 = scalar_select %p292, %s20, 1
        %p294 = scmp.lt.s32.totalorder %s291, 7
        %s295 = scalar_select %p294, %s291, 7
        %p296 = scmp.lt.s32.totalorder %s21, 0
        %s297 = scalar_select %p296, %s21, 0
        %s298 = sadd.s32 %s297, %s295
        %s299 = smul.addr %s293, 8
        %s300 = sadd.s32 %s298, %s299
        %s301 = smul.addr %s300, 8
        %s302 = scalar_lea.vmem %s1, %s301
      $region40: #{lif_forward.1} parent=35 // pred_fallthru
        _
    $region36: #{lif_forward.1} parent=5 // pred_fallthru
      _
  $region6: #{lif_forward.1} parent=0 // loop_footer
    %s11 = sadd.s32 1, %s7
  $region7: #{lif_forward.1} parent=0 // loop_footer_branch
    %6 = sbr.rel target = $region3
  $region8: #{lif_forward.1} parent=0 // loop_exit
    _

</llo_original>
